<compile_context>
chip_gen: v7x
topology: tpu7x:2x2x1
jax: 0.10.0
libtpu: 0.0.40
codegen_flags: <defaults>
</compile_context>

<pallas_src>
import functools

import jax
import jax.numpy as jnp
from jax.experimental import pallas as pl
from jax.experimental.pallas import tpu as pltpu


def _round_up(x, m):
    return ((x + m - 1) // m) * m


# Safe scoped-VMEM request on all generations: v5e/v6e have 128 MiB physical,
# v7x has 64 MiB physical; worst-case buffer budget here is ~25 MiB.
VMEM_LIMIT = 48 * 1024 * 1024


def _pick_tiles(n_pad):
    """Row tile tm (sublane) and reduction tile tk (lane); both divide n_pad."""
    if n_pad <= 2048:
        tk = n_pad                                    # single reduction step
        tm = n_pad if n_pad == 128 else n_pad // 2    # >=2 row tiles (megacore)
    else:
        tk = next(c for c in (2048, 1024, 512, 256, 128) if n_pad % c == 0)
        tm = next(c for c in (1024, 512, 256, 128) if n_pad % c == 0)
    return tm, tk


# ---------------------------------------------------------------------------
# Kernel 1: linear projection  xw = x @ W^T   (bias added post-aggregation)
# Computed in f32, emitted as bf16 to feed the bf16 MXU aggregation matmul.
# ---------------------------------------------------------------------------
def linear_kernel(x_ref, w_ref, xw_ref):
    xw_ref[...] = jnp.dot(
        x_ref[...], w_ref[...],
        preferred_element_type=jnp.float32).astype(xw_ref.dtype)


# ---------------------------------------------------------------------------
# Kernel 2: row-normalized aggregation  out = (adj @ xw) * (1/deg) + b
#   grid = (row tiles [parallel], adjacency-column tiles [reduction])
#   Output block index is constant across k -> out_ref is the accumulator.
# ---------------------------------------------------------------------------
def aggregate_kernel(adj_ref, xw_ref, invdeg_ref, b_ref, out_ref, *,
                     tk, xw_resident):
    k = pl.program_id(1)

    @pl.when(k == 0)
    def _():
        out_ref[...] = jnp.zeros_like(out_ref)

    # int8 adjacency ({0,1,2} exact) widened to bf16; bf16 x bf16 MXU matmul
    # with f32 accumulation directly into the resident output block.
    adj = adj_ref[...].astype(jnp.bfloat16)
    if xw_resident:
        start = pl.multiple_of(k * tk, 128)
        xw = xw_ref[pl.ds(start, tk), :]
    else:
        xw = xw_ref[...]
    out_ref[...] += jnp.dot(adj, xw, preferred_element_type=jnp.float32)

    @pl.when(k == pl.num_programs(1) - 1)
    def _():
        out_ref[...] = out_ref[...] * invdeg_ref[...] + b_ref[...]


def simple_gcn_conv(x, edge_index, weight, bias):
    """x: (N, Cin) f32, edge_index: (2, E) int32,
       weight: (Cout, Cin) f32 (PyTorch layout), bias: (Cout,) f32."""
    n, cin = x.shape
    cout = weight.shape[0]

    # ---- plain-JAX glue: data-dependent adjacency scatter + degrees ----
    # TODO(synk): for large/sparse graphs build CSR + scalar-prefetch gather
    # instead of materializing the dense (N, N) adjacency.
    adj = jnp.zeros((n, n), jnp.float32)
    adj = adj.at[edge_index[0], edge_index[1]].set(1.0)
    adj = adj + jnp.eye(n, dtype=jnp.float32)
    deg = jnp.sum(adj, axis=1, keepdims=True)
    deg = jnp.where(deg > 0, deg, jnp.ones_like(deg))
    inv_deg = (1.0 / deg).astype(jnp.float32)     # exact f32, O(N)
    adj_i8 = adj.astype(jnp.int8)                 # {0,1,2} exact; halves HBM bytes

    # ---- padding / tiling ----
    n_pad = _round_up(n, 128)                     # minimal padding granularity
    cout_pad = _round_up(cout, 128)               # lane-dense output / MXU width
    tm, tk = _pick_tiles(n_pad)

    adj_p = jnp.pad(adj_i8, ((0, n_pad - n), (0, n_pad - n)))
    x_p = jnp.pad(x.astype(jnp.float32), ((0, n_pad - n), (0, 0)))
    invdeg_p = jnp.pad(inv_deg, ((0, n_pad - n), (0, 0)), constant_values=1.0)
    w_t = jnp.pad(weight.T.astype(jnp.float32),
                  ((0, 0), (0, cout_pad - cout)))
    b2d = jnp.pad(bias.astype(jnp.float32).reshape(1, cout),
                  ((0, 0), (0, cout_pad - cout)))

    # ---- Pallas kernel 1: xw = x @ W^T (row-tiled, bf16 lane-dense output) ----
    xw = pl.pallas_call(
        linear_kernel,
        out_shape=jax.ShapeDtypeStruct((n_pad, cout_pad), jnp.bfloat16),
        grid=(n_pad // tm,),
        in_specs=[
            pl.BlockSpec((tm, cin), lambda i: (i, 0)),
            pl.BlockSpec((cin, cout_pad), lambda i: (0, 0)),
        ],
        out_specs=pl.BlockSpec((tm, cout_pad), lambda i: (i, 0)),
        compiler_params=pltpu.CompilerParams(
            dimension_semantics=("parallel",),
            vmem_limit_bytes=VMEM_LIMIT),
    )(x_p, w_t)

    # ---- Pallas kernel 2: out = (adj @ xw) * (1/deg) + b ----
    # Keep xw fully resident in VMEM when small (single HBM read); otherwise
    # stream one (tk, cout_pad) slab per reduction step.
    xw_resident = n_pad * cout_pad * 2 <= 8 * 1024 * 1024
    if xw_resident:
        xw_spec = pl.BlockSpec((n_pad, cout_pad), lambda i, k: (0, 0))
    else:
        xw_spec = pl.BlockSpec((tk, cout_pad), lambda i, k: (k, 0))

    kernel = functools.partial(aggregate_kernel, tk=tk, xw_resident=xw_resident)
    out_p = pl.pallas_call(
        kernel,
        out_shape=jax.ShapeDtypeStruct((n_pad, cout_pad), jnp.float32),
        grid=(n_pad // tm, n_pad // tk),
        in_specs=[
            pl.BlockSpec((tm, tk), lambda i, k: (i, k)),       # int8 adjacency tile
            xw_spec,                                           # bf16 projected feats
            pl.BlockSpec((tm, 1), lambda i, k: (i, 0)),        # 1/deg
            pl.BlockSpec((1, cout_pad), lambda i, k: (0, 0)),  # bias
        ],
        out_specs=pl.BlockSpec((tm, cout_pad), lambda i, k: (i, 0)),
        compiler_params=pltpu.CompilerParams(
            dimension_semantics=("parallel", "arbitrary"),
            vmem_limit_bytes=VMEM_LIMIT),
    )(adj_p, xw, invdeg_p, b2d)

    return out_p[:n, :cout].astype(x.dtype)


def _reference(x, edge_index, weight, bias):
    """Pure-JAX reference mirroring the PyTorch forward."""
    n = x.shape[0]
    adj = jnp.zeros((n, n), jnp.float32).at[edge_index[0], edge_index[1]].set(1.0)
    adj = adj + jnp.eye(n, dtype=jnp.float32)
    deg = adj.sum(axis=1, keepdims=True)
    deg = jnp.where(deg > 0, deg, jnp.ones_like(deg))
    adj = adj / deg
    return (adj @ x) @ weight.T + bias


if __name__ == "__main__":
    key = jax.random.PRNGKey(0)
    k_x, k_w, k_b, k_e = jax.random.split(key, 4)

    num_nodes = 8
    in_channels = 16
    out_channels = 8
    num_edges = 12

    x = jax.random.normal(k_x, (num_nodes, in_channels), dtype=jnp.float32)
    # deterministic parameter init (synthetic; not a checkpoint load)
    bound = 1.0 / jnp.sqrt(in_channels)
    weight = jax.random.uniform(
        k_w, (out_channels, in_channels), minval=-bound, maxval=bound,
        dtype=jnp.float32)
    bias = jax.random.uniform(
        k_b, (out_channels,), minval=-bound, maxval=bound, dtype=jnp.float32)
    edge_index = jax.random.randint(
        k_e, (2, num_edges), 0, num_nodes, dtype=jnp.int32)

    out = simple_gcn_conv(x, edge_index, weight, bias)
    out = jax.block_until_ready(out)

    ref = _reference(x, edge_index, weight, bias)
    assert out.shape == (num_nodes, out_channels)
    # xw is carried in bf16 (f32 accumulation preserved); tolerance reflects
    # bf16 rounding of the projected features.
    assert jnp.allclose(out, ref, atol=2e-2, rtol=2e-2), "mismatch vs reference"

    print("KERNEL_OK")
</pallas_src>

<mosaic_0001>
module attributes {stable_mosaic.version = 11 : i64} {
  func.func @linear_kernel(%arg0: i32, %arg1: memref<128x16xf32, #tpu.memory_space<vmem>>, %arg2: memref<16x128xf32, #tpu.memory_space<vmem>>, %arg3: memref<128x128xbf16, #tpu.memory_space<vmem>>) attributes {dimension_semantics = [#tpu.dimension_semantics<parallel>], iteration_bounds = array<i64: 1>, scalar_prefetch = 0 : i64, scratch_operands = 0 : i64, tpu.core_type = #tpu.core_type<tc>, window_params = [{transform_indices = @transform_0, window_bounds = array<i64: 128, 16>}, {pipeline_mode = #tpu.pipeline_mode<synchronous>, transform_indices = @transform_1, window_bounds = array<i64: 16, 128>}, {transform_indices = @transform_2, window_bounds = array<i64: 128, 128>}]} {
    %c0 = arith.constant 0 : index
    %c0_0 = arith.constant 0 : index
    %0 = vector.load %arg1[%c0, %c0_0] : memref<128x16xf32, #tpu.memory_space<vmem>>, vector<128x16xf32>
    %c0_1 = arith.constant 0 : index
    %c0_2 = arith.constant 0 : index
    %1 = vector.load %arg2[%c0_1, %c0_2] : memref<16x128xf32, #tpu.memory_space<vmem>>, vector<16x128xf32>
    %cst = arith.constant dense<0.000000e+00> : vector<128x128xf32>
    %2 = tpu.matmul %0, %1, %cst {dimension_numbers = #tpu.dot_dimension_numbers<[1], [0], [0], [1], [0, 0, 1, 1], [], []>} : vector<128x16xf32>, vector<16x128xf32>, vector<128x128xf32> -> vector<128x128xf32>
    %3 = arith.truncf %2 : vector<128x128xf32> to vector<128x128xbf16>
    %c0_3 = arith.constant 0 : index
    %c0_4 = arith.constant 0 : index
    %4 = vector.load %arg3[%c0_3, %c0_4] : memref<128x128xbf16, #tpu.memory_space<vmem>>, vector<128x128xbf16>
    tpu.vector_store %arg3[%c0_3, %c0_4], %3 {strides = array<i32>} : memref<128x128xbf16, #tpu.memory_space<vmem>>, vector<128x128xbf16>,
    return
  }
  func.func @transform_0(%arg0: i32) -> (i32, i32) {
    %c0_i32 = arith.constant 0 : i32
    %c0_i32_0 = arith.constant 0 : i32
    return %arg0, %c0_i32 : i32, i32
  }
  func.func @transform_1(%arg0: i32) -> (i32, i32) {
    %c0_i32 = arith.constant 0 : i32
    %c0_i32_0 = arith.constant 0 : i32
    %c0_i32_1 = arith.constant 0 : i32
    return %c0_i32, %c0_i32_0 : i32, i32
  }
  func.func @transform_2(%arg0: i32) -> (i32, i32) {
    %c0_i32 = arith.constant 0 : i32
    %c0_i32_0 = arith.constant 0 : i32
    return %arg0, %c0_i32 : i32, i32
  }
}

</mosaic_0001>

<llo_original>
// kernel: tpu_custom_call.1
$region0: #{tpu_custom_call.1}
  #allocation0 [shape = 'u32[]', space=smem, size = 0x4, offset = 0x4, fixed_abs, tag = 'smem constant byte address 0x4 - core index']
  #allocation1 [shape = 'u32[144,128]{1,0:T(1,128)}', space=vmem, size = 0x12000, scoped, tag = 'internal scratch']
  %s0 = inlined_call_operand.vmem [shape: f32[128,16], index: 0, kind: input, shape index: {}]
  %s1 = inlined_call_operand.vmem [shape: f32[16,128], index: 1, kind: input, shape index: {}]
  %s2 = inlined_call_operand.hbm [shape: bf16[128,128], index: 2, kind: output, shape index: {}]
  %s3 = sld [smem:[#allocation0]]
  $region18: #{tpu_custom_call.1} parent=0
    _
  %s5 = ssub.s32 1, %s3
  %s6 = scalar_select 0, %s5, %s3
  $region1: #{tpu_custom_call.1} parent=0
    #allocation2 [shape = 'u8[32768]{0}', space=vmem, size = 0x8000, scoped, tag = 'output window, operand 0, single buffered']
    #allocation3 [shape = 's32[1]{0}', space=sflag, size = 0x4, scoped, tag = 'scoped memory for tpu_custom_call.1']
    %7 = vsyncpa [#allocation3], 0
    // Predicated region
    $region2: #{tpu_custom_call.1} parent=1 // pred_check
      _
    $region3: #{tpu_custom_call.1} parent=1 // pred_check_branch
      %9 = sbr.rel (0) target = $region5
    $region4: #{tpu_custom_call.1} parent=1 // pred_region
      _
    $region5: #{tpu_custom_call.1} parent=1 // pred_fallthru
      _
    // Predicated region
    $region6: #{tpu_custom_call.1} parent=1 // pred_check
      _
    $region7: #{tpu_custom_call.1} parent=1 // pred_check_branch
      %11 = sbr.rel (0) target = $region9
    $region8: #{tpu_custom_call.1} parent=1 // pred_region
      _
    $region9: #{tpu_custom_call.1} parent=1 // pred_fallthru
      _
    %v12 = vld [vmem:[%s0] sm:$0xff]
    %v13 = vld [vmem:[%s0 + $0x8] sm:$0xff]
    %v14 = vld [vmem:[%s0 + $0x10] sm:$0xff]
    %v15 = vld [vmem:[%s0 + $0x18] sm:$0xff]
    %v16 = vld [vmem:[%s0 + $0x20] sm:$0xff]
    %v17 = vld [vmem:[%s0 + $0x28] sm:$0xff]
    %v18 = vld [vmem:[%s0 + $0x30] sm:$0xff]
    %v19 = vld [vmem:[%s0 + $0x38] sm:$0xff]
    %v20 = vld [vmem:[%s0 + $0x40] sm:$0xff]
    %v21 = vld [vmem:[%s0 + $0x48] sm:$0xff]
    %v22 = vld [vmem:[%s0 + $0x50] sm:$0xff]
    %v23 = vld [vmem:[%s0 + $0x58] sm:$0xff]
    %v24 = vld [vmem:[%s0 + $0x60] sm:$0xff]
    %v25 = vld [vmem:[%s0 + $0x68] sm:$0xff]
    %v26 = vld [vmem:[%s0 + $0x70] sm:$0xff]
    %v27 = vld [vmem:[%s0 + $0x78] sm:$0xff]
    %v28 = vld [vmem:[%s1] sm:$0xff]
    %v29 = vld [vmem:[%s1 + $0x8] sm:$0xff]
    %vm30 = vcmask 130048
    %v32 = vsel %vm30, %v12, 0
    %v35 = vsel %vm30, %v13, 0
    %v38 = vsel %vm30, %v14, 0
    %v41 = vsel %vm30, %v15, 0
    %v44 = vsel %vm30, %v16, 0
    %v47 = vsel %vm30, %v17, 0
    %v50 = vsel %vm30, %v18, 0
    %v53 = vsel %vm30, %v19, 0
    %v56 = vsel %vm30, %v20, 0
    %v59 = vsel %vm30, %v21, 0
    %v62 = vsel %vm30, %v22, 0
    %v65 = vsel %vm30, %v23, 0
    %v68 = vsel %vm30, %v24, 0
    %v71 = vsel %vm30, %v25, 0
    %v74 = vsel %vm30, %v26, 0
    %v77 = vsel %vm30, %v27, 0
    %79 = vmatprep.subr.mxu0 0.0
    %80 = vmatpush1.msra.mxu0 %v28
    %81 = vmatprep.subr.mxu0 0.0
    %82 = vmatpush1.msra.mxu0 %v29
    %83 = vmatprep.subr.mxu0 0.0
    %84 = vmatpush1.msra.mxu0 0.0
    %85 = vmatprep.subr.mxu0 0.0
    %86 = vmatpush1.msra.mxu0 0.0
    %87 = vmatprep.subr.mxu0 0.0
    %88 = vmatpush1.msra.mxu0 0.0
    %89 = vmatprep.subr.mxu0 0.0
    %90 = vmatpush1.msra.mxu0 0.0
    %91 = vmatprep.subr.mxu0 0.0
    %92 = vmatpush1.msra.mxu0 0.0
    %93 = vmatprep.subr.mxu0 0.0
    %94 = vmatpush1.msra.mxu0 0.0
    %95 = vmatprep.subr.mxu0 0.0
    %96 = vmatpush1.msra.mxu0 0.0
    %97 = vmatprep.subr.mxu0 0.0
    %98 = vmatpush1.msra.mxu0 0.0
    %99 = vmatprep.subr.mxu0 0.0
    %100 = vmatpush1.msra.mxu0 0.0
    %101 = vmatprep.subr.mxu0 0.0
    %102 = vmatpush1.msra.mxu0 0.0
    %103 = vmatprep.subr.mxu0 0.0
    %104 = vmatpush1.msra.mxu0 0.0
    %105 = vmatprep.subr.mxu0 0.0
    %106 = vmatpush1.msra.mxu0 0.0
    %107 = vmatprep.subr.mxu0 0.0
    %108 = vmatpush1.msra.mxu0 0.0
    %109 = vmatprep.subr.mxu0 0.0
    %110 = vmatpush1.msra.mxu0 0.0
    %111 = vmatprep.subr.mxu0 0.0
    %112 = vmatpush1.msra.mxu0 0.0
    %113 = vmatprep.subr.mxu0 0.0
    %114 = vmatpush1.msra.mxu0 0.0
    %115 = vmatprep.subr.mxu0 0.0
    %116 = vmatpush1.msra.mxu0 0.0
    %117 = vmatprep.subr.mxu0 0.0
    %118 = vmatpush1.msra.mxu0 0.0
    %119 = vmatprep.subr.mxu0 0.0
    %120 = vmatpush1.msra.mxu0 0.0
    %121 = vmatprep.subr.mxu0 0.0
    %122 = vmatpush1.msra.mxu0 0.0
    %123 = vmatprep.subr.mxu0 0.0
    %124 = vmatpush1.msra.mxu0 0.0
    %125 = vmatprep.subr.mxu0 0.0
    %126 = vmatpush1.msra.mxu0 0.0
    %127 = vmatprep.subr.mxu0 0.0
    %128 = vmatpush1.msra.mxu0 0.0
    %129 = vmatprep.subr.mxu0 0.0
    %130 = vmatpush1.msra.mxu0 0.0
    %131 = vmatprep.subr.mxu0 0.0
    %132 = vmatpush1.msra.mxu0 0.0
    %133 = vmatprep.subr.mxu0 0.0
    %134 = vmatpush1.msra.mxu0 0.0
    %135 = vmatprep.subr.mxu0 0.0
    %136 = vmatpush1.msra.mxu0 0.0
    %137 = vmatprep.subr.mxu0 0.0
    %138 = vmatpush1.msra.mxu0 0.0
    %139 = vmatprep.subr.mxu0 0.0
    %140 = vmatpush1.msra.mxu0 0.0
    %141 = vmatprep.subr.mxu0 0.0
    %142 = vmatpush1.msra.mxu0 0.0
    %143 = vmatprep.mubr.f32.mxu0 0.0
    %144 = vmatmul.mubr.f32.gmra.mrb[0].mxu0 %v32
    %v145 = vpop.f32.mrb[0].mxu0
    %v146 = vadd.f32 0.0, %v145
    %v147 = vpop.f32.mrb[0].mxu0
    %148 = vmatprep.mubr.f32.mxu0 0.0
    %149 = vmatmul.mubr.f32.gmra.mrb[0].mxu0 %v35
    %v150 = vpop.f32.mrb[0].mxu0
    %v151 = vadd.f32 0.0, %v150
    %v152 = vpop.f32.mrb[0].mxu0
    %153 = vmatprep.mubr.f32.mxu0 0.0
    %154 = vmatmul.mubr.f32.gmra.mrb[0].mxu0 %v38
    %v155 = vpop.f32.mrb[0].mxu0
    %v156 = vadd.f32 0.0, %v155
    %v157 = vpop.f32.mrb[0].mxu0
    %158 = vmatprep.mubr.f32.mxu0 0.0
    %159 = vmatmul.mubr.f32.gmra.mrb[0].mxu0 %v41
    %v160 = vpop.f32.mrb[0].mxu0
    %v161 = vadd.f32 0.0, %v160
    %v162 = vpop.f32.mrb[0].mxu0
    %163 = vmatprep.mubr.f32.mxu0 0.0
    %164 = vmatmul.mubr.f32.gmra.mrb[0].mxu0 %v44
    %v165 = vpop.f32.mrb[0].mxu0
    %v166 = vadd.f32 0.0, %v165
    %v167 = vpop.f32.mrb[0].mxu0
    %168 = vmatprep.mubr.f32.mxu0 0.0
    %169 = vmatmul.mubr.f32.gmra.mrb[0].mxu0 %v47
    %v170 = vpop.f32.mrb[0].mxu0
    %v171 = vadd.f32 0.0, %v170
    %v172 = vpop.f32.mrb[0].mxu0
    %173 = vmatprep.mubr.f32.mxu0 0.0
    %174 = vmatmul.mubr.f32.gmra.mrb[0].mxu0 %v50
    %v175 = vpop.f32.mrb[0].mxu0
    %v176 = vadd.f32 0.0, %v175
    %v177 = vpop.f32.mrb[0].mxu0
    %178 = vmatprep.mubr.f32.mxu0 0.0
    %179 = vmatmul.mubr.f32.gmra.mrb[0].mxu0 %v53
    %v180 = vpop.f32.mrb[0].mxu0
    %v181 = vadd.f32 0.0, %v180
    %v182 = vpop.f32.mrb[0].mxu0
    %183 = vmatprep.mubr.f32.mxu0 0.0
    %184 = vmatmul.mubr.f32.gmra.mrb[0].mxu0 %v56
    %v185 = vpop.f32.mrb[0].mxu0
    %v186 = vadd.f32 0.0, %v185
    %v187 = vpop.f32.mrb[0].mxu0
    %188 = vmatprep.mubr.f32.mxu0 0.0
    %189 = vmatmul.mubr.f32.gmra.mrb[0].mxu0 %v59
    %v190 = vpop.f32.mrb[0].mxu0
    %v191 = vadd.f32 0.0, %v190
    %v192 = vpop.f32.mrb[0].mxu0
    %193 = vmatprep.mubr.f32.mxu0 0.0
    %194 = vmatmul.mubr.f32.gmra.mrb[0].mxu0 %v62
    %v195 = vpop.f32.mrb[0].mxu0
    %v196 = vadd.f32 0.0, %v195
    %v197 = vpop.f32.mrb[0].mxu0
    %198 = vmatprep.mubr.f32.mxu0 0.0
    %199 = vmatmul.mubr.f32.gmra.mrb[0].mxu0 %v65
    %v200 = vpop.f32.mrb[0].mxu0
    %v201 = vadd.f32 0.0, %v200
    %v202 = vpop.f32.mrb[0].mxu0
    %203 = vmatprep.mubr.f32.mxu0 0.0
    %204 = vmatmul.mubr.f32.gmra.mrb[0].mxu0 %v68
    %v205 = vpop.f32.mrb[0].mxu0
    %v206 = vadd.f32 0.0, %v205
    %v207 = vpop.f32.mrb[0].mxu0
    %208 = vmatprep.mubr.f32.mxu0 0.0
    %209 = vmatmul.mubr.f32.gmra.mrb[0].mxu0 %v71
    %v210 = vpop.f32.mrb[0].mxu0
    %v211 = vadd.f32 0.0, %v210
    %v212 = vpop.f32.mrb[0].mxu0
    %213 = vmatprep.mubr.f32.mxu0 0.0
    %214 = vmatmul.mubr.f32.gmra.mrb[0].mxu0 %v74
    %v215 = vpop.f32.mrb[0].mxu0
    %v216 = vadd.f32 0.0, %v215
    %v217 = vpop.f32.mrb[0].mxu0
    %218 = vmatprep.mubr.f32.mxu0 0.0
    %219 = vmatmul.mubr.f32.gmra.mrb[0].mxu0 %v77
    %v220 = vpop.f32.mrb[0].mxu0
    %v221 = vadd.f32 0.0, %v220
    %v222 = vpop.f32.mrb[0].mxu0
    %223 = vdwg.mxu0
    %v224 = vpack.c.bf16 %v151, %v146
    %v225 = vpack.c.bf16 %v161, %v156
    %v226 = vpack.c.bf16 %v171, %v166
    %v227 = vpack.c.bf16 %v181, %v176
    %v228 = vpack.c.bf16 %v191, %v186
    %v229 = vpack.c.bf16 %v201, %v196
    %v230 = vpack.c.bf16 %v211, %v206
    %v231 = vpack.c.bf16 %v221, %v216
    %v240 = vunpack.c.l.b16 %v224
    %v241 = vunpack.c.h.b16 %v224
    %v242 = vunpack.c.l.b16 %v225
    %v243 = vunpack.c.h.b16 %v225
    %v244 = vunpack.c.l.b16 %v226
    %v245 = vunpack.c.h.b16 %v226
    %v246 = vunpack.c.l.b16 %v227
    %v247 = vunpack.c.h.b16 %v227
    %v248 = vunpack.c.l.b16 %v228
    %v249 = vunpack.c.h.b16 %v228
    %v250 = vunpack.c.l.b16 %v229
    %v251 = vunpack.c.h.b16 %v229
    %v252 = vunpack.c.l.b16 %v230
    %v253 = vunpack.c.h.b16 %v230
    %v254 = vunpack.c.l.b16 %v231
    %v255 = vunpack.c.h.b16 %v231
    %v256 = vpack.c.b16 %v240, %v240
    %v257 = vpack.c.b16 %v241, %v241
    %v258 = vpack.c.b16 %v242, %v242
    %v259 = vpack.c.b16 %v243, %v243
    %v260 = vpack.c.b16 %v244, %v244
    %v261 = vpack.c.b16 %v245, %v245
    %v262 = vpack.c.b16 %v246, %v246
    %v263 = vpack.c.b16 %v247, %v247
    %v264 = vpack.c.b16 %v248, %v248
    %v265 = vpack.c.b16 %v249, %v249
    %v266 = vpack.c.b16 %v250, %v250
    %v267 = vpack.c.b16 %v251, %v251
    %v268 = vpack.c.b16 %v252, %v252
    %v269 = vpack.c.b16 %v253, %v253
    %v270 = vpack.c.b16 %v254, %v254
    %v271 = vpack.c.b16 %v255, %v255
    %288 = vst [vmem:[#allocation2] sm:$0xf] %v256
    %289 = vst [vmem:[#allocation2 + $0x4] sm:$0xf] %v257
    %290 = vst [vmem:[#allocation2 + $0x8] sm:$0xf] %v258
    %291 = vst [vmem:[#allocation2 + $0xc] sm:$0xf] %v259
    %292 = vst [vmem:[#allocation2 + $0x10] sm:$0xf] %v260
    %293 = vst [vmem:[#allocation2 + $0x14] sm:$0xf] %v261
    %294 = vst [vmem:[#allocation2 + $0x18] sm:$0xf] %v262
    %295 = vst [vmem:[#allocation2 + $0x1c] sm:$0xf] %v263
    %296 = vst [vmem:[#allocation2 + $0x20] sm:$0xf] %v264
    %297 = vst [vmem:[#allocation2 + $0x24] sm:$0xf] %v265
    %298 = vst [vmem:[#allocation2 + $0x28] sm:$0xf] %v266
    %299 = vst [vmem:[#allocation2 + $0x2c] sm:$0xf] %v267
    %300 = vst [vmem:[#allocation2 + $0x30] sm:$0xf] %v268
    %301 = vst [vmem:[#allocation2 + $0x34] sm:$0xf] %v269
    %302 = vst [vmem:[#allocation2 + $0x38] sm:$0xf] %v270
    %303 = vst [vmem:[#allocation2 + $0x3c] sm:$0xf] %v271
    // Predicated region
    $region10: #{tpu_custom_call.1} parent=1 // pred_check
      _
    $region11: #{tpu_custom_call.1} parent=1 // pred_check_branch
      %305 = sbr.rel (0) target = $region13
    $region12: #{tpu_custom_call.1} parent=1 // pred_region
      %s307 = ssub.s32 1024, 1024
      %308 = vsyncadd [#allocation3], %s307
      %s309 = sshll.u32 [#allocation2], 4
      %s310 = int_to_ptr.vmem [resolvable:$true] %s309
      %315 = dma.vmem_to_hbm [thread:$0]  %s310, 1024, %s2, [#allocation3], 64, 64, 4
    $region13: #{tpu_custom_call.1} parent=1 // pred_fallthru
      _
    // Predicated region
    $region14: #{tpu_custom_call.1} parent=1 // pred_check
      _
    $region15: #{tpu_custom_call.1} parent=1 // pred_check_branch
      %317 = sbr.rel (0) target = $region17
    $region16: #{tpu_custom_call.1} parent=1 // pred_region
      %318 = dma.done [#allocation3], 1024
    $region17: #{tpu_custom_call.1} parent=1 // pred_fallthru
      _
    %319 = vsyncpa [#allocation3], 1

</llo_original>
